<compile_context>
chip_gen: v6e
topology: v6e:2x2x1
jax: 0.10.0
libtpu: 0.0.40
codegen_flags: <defaults>
</compile_context>

<pallas_src>
import jax
import jax.numpy as jnp
from jax.experimental import pallas as pl
from jax.experimental.pallas import tpu as pltpu


def _maxout_kernel(x_ref, w1_ref, b1_ref, w2_ref, b2_ref, o_ref,
                   acc1_ref, acc2_ref):
    k = pl.program_id(2)

    @pl.when(k == 0)
    def _():
        acc1_ref[...] = jnp.zeros_like(acc1_ref)
        acc2_ref[...] = jnp.zeros_like(acc2_ref)

    x = x_ref[...]
    acc1_ref[...] += jnp.dot(x, w1_ref[...], preferred_element_type=jnp.float32)
    acc2_ref[...] += jnp.dot(x, w2_ref[...], preferred_element_type=jnp.float32)

    @pl.when(k == pl.num_programs(2) - 1)
    def _():
        z1 = acc1_ref[...] + b1_ref[...].astype(jnp.float32)
        z2 = acc2_ref[...] + b2_ref[...].astype(jnp.float32)
        # torch ref: mask = z1 >= z2; out[mask] = z1; out[~mask] = z2  ==  max(z1, z2)
        o_ref[...] = jnp.maximum(z1, z2).astype(o_ref.dtype)


def _pick_tile(dim: int, candidates) -> int:
    """Largest candidate that evenly divides `dim`; else the full extent."""
    for c in candidates:
        if dim >= c and dim % c == 0:
            return c
    return dim


def maxout_pallas(x: jax.Array,
                  w1: jax.Array, b1: jax.Array,
                  w2: jax.Array, b2: jax.Array) -> jax.Array:
    """Maxout forward. x: [M, K], w*: [N, K], b*: [N] -> [M, N]."""
    M, K = x.shape
    N, K2 = w1.shape
    assert K == K2 and w2.shape == (N, K) and b1.shape == (N,) and b2.shape == (N,)

    # Put the contraction dim on sublanes and the output dim on lanes:
    # weights become (K, N) so the MXU consumes them directly and the output
    # tile is lane-dense along N.
    w1t = w1.T
    w2t = w2.T
    b1r = b1.reshape(1, N)
    b2r = b2.reshape(1, N)

    # Tile sizes: lane-dense (multiples of 128) when possible, otherwise the
    # full (small) extent. Block bytes stay well under v7x's 64 MiB VMEM:
    # worst case x(256x512) + 2*W(512x512) + 2*acc(256x512) f32 ~= 4 MiB,
    # double-buffered inputs still leave ample headroom.
    tm = _pick_tile(M, (256, 128, 64, 32, 16, 8))
    tn = _pick_tile(N, (512, 256, 128))
    tk = _pick_tile(K, (512, 256, 128))
    grid = (M // tm, N // tn, K // tk)

    out_dtype = x.dtype
    itemsize = jnp.dtype(out_dtype).itemsize
    cost = pl.CostEstimate(
        flops=4 * M * N * K,                      # two matmuls
        transcendentals=0,
        bytes_accessed=(x.size + 2 * w1t.size + 2 * b1r.size + M * N) * itemsize,
    )

    return pl.pallas_call(
        _maxout_kernel,
        out_shape=jax.ShapeDtypeStruct((M, N), out_dtype),
        grid_spec=pltpu.PrefetchScalarGridSpec(
            num_scalar_prefetch=0,
            grid=grid,
            in_specs=[
                pl.BlockSpec((tm, tk), lambda i, j, k: (i, k)),   # x tile
                pl.BlockSpec((tk, tn), lambda i, j, k: (k, j)),   # W1^T tile
                pl.BlockSpec((1, tn), lambda i, j, k: (0, j)),    # b1 tile
                pl.BlockSpec((tk, tn), lambda i, j, k: (k, j)),   # W2^T tile
                pl.BlockSpec((1, tn), lambda i, j, k: (0, j)),    # b2 tile
            ],
            out_specs=pl.BlockSpec((tm, tn), lambda i, j, k: (i, j)),
            scratch_shapes=[pltpu.VMEM((tm, tn), jnp.float32),
                            pltpu.VMEM((tm, tn), jnp.float32)],
        ),
        compiler_params=pltpu.CompilerParams(
            dimension_semantics=("parallel", "parallel", "arbitrary")),
        cost_estimate=cost,
    )(x, w1t, b1r, w2t, b2r)


if __name__ == "__main__":
    key = jax.random.PRNGKey(0)
    k0, k1, k2, k3, k4 = jax.random.split(key, 5)

    # Small shapes implied by the forward: inputs [batch, input_dim].
    batch, input_dim, output_dim = 2, 32, 16

    x = jax.random.normal(k0, (batch, input_dim), dtype=jnp.float32)
    w1 = jax.random.normal(k1, (output_dim, input_dim), dtype=jnp.float32) * 0.1
    b1 = jax.random.normal(k2, (output_dim,), dtype=jnp.float32) * 0.1
    w2 = jax.random.normal(k3, (output_dim, input_dim), dtype=jnp.float32) * 0.1
    b2 = jax.random.normal(k4, (output_dim,), dtype=jnp.float32) * 0.1

    out = maxout_pallas(x, w1, b1, w2, b2)
    out = jax.block_until_ready(out)

    # Pure-JAX reference (forward semantics of MaxoutFunction).
    z1 = x @ w1.T + b1
    z2 = x @ w2.T + b2
    ref = jnp.maximum(z1, z2)

    assert out.shape == (batch, output_dim) and out.dtype == x.dtype
    assert jnp.allclose(out, ref, atol=1e-5, rtol=1e-5)

    print("KERNEL_OK")
</pallas_src>

<mosaic_0001>
module attributes {stable_mosaic.version = 11 : i64} {
  func.func @_maxout_kernel(%arg0: i32, %arg1: i32, %arg2: i32, %arg3: memref<2x32xf32, #tpu.memory_space<vmem>>, %arg4: memref<32x16xf32, #tpu.memory_space<vmem>>, %arg5: memref<1x16xf32, #tpu.memory_space<vmem>>, %arg6: memref<32x16xf32, #tpu.memory_space<vmem>>, %arg7: memref<1x16xf32, #tpu.memory_space<vmem>>, %arg8: memref<2x16xf32, #tpu.memory_space<vmem>>, %arg9: memref<2x16xf32, #tpu.memory_space<vmem>>, %arg10: memref<2x16xf32, #tpu.memory_space<vmem>>) attributes {dimension_semantics = [#tpu.dimension_semantics<parallel>, #tpu.dimension_semantics<parallel>, #tpu.dimension_semantics<arbitrary>], iteration_bounds = array<i64: 1, 1, 1>, scalar_prefetch = 0 : i64, scratch_operands = 2 : i64, tpu.core_type = #tpu.core_type<tc>, window_params = [{transform_indices = @transform_0, window_bounds = array<i64: 2, 32>}, {transform_indices = @transform_1, window_bounds = array<i64: 32, 16>}, {transform_indices = @transform_2, window_bounds = array<i64: 1, 16>}, {transform_indices = @transform_3, window_bounds = array<i64: 32, 16>}, {transform_indices = @transform_4, window_bounds = array<i64: 1, 16>}, {transform_indices = @transform_5, window_bounds = array<i64: 2, 16>}]} {
    %c0_i32 = arith.constant 0 : i32
    %0 = arith.cmpi eq, %arg2, %c0_i32 : i32
    %1 = arith.extui %0 : i1 to i32
    %c0_i32_0 = arith.constant 0 : i32
    %2 = arith.cmpi ne, %1, %c0_i32_0 : i32
    scf.if %2 {
      %cst_17 = arith.constant 0.000000e+00 : f32
      %17 = vector.broadcast %cst_17 : f32 to vector<2x16xf32>
      %c0_18 = arith.constant 0 : index
      %c0_19 = arith.constant 0 : index
      %18 = vector.load %arg9[%c0_18, %c0_19] : memref<2x16xf32, #tpu.memory_space<vmem>>, vector<2x16xf32>
      tpu.vector_store %arg9[%c0_18, %c0_19], %17 {strides = array<i32>} : memref<2x16xf32, #tpu.memory_space<vmem>>, vector<2x16xf32>,
      %cst_20 = arith.constant 0.000000e+00 : f32
      %19 = vector.broadcast %cst_20 : f32 to vector<2x16xf32>
      %c0_21 = arith.constant 0 : index
      %c0_22 = arith.constant 0 : index
      %20 = vector.load %arg10[%c0_21, %c0_22] : memref<2x16xf32, #tpu.memory_space<vmem>>, vector<2x16xf32>
      tpu.vector_store %arg10[%c0_21, %c0_22], %19 {strides = array<i32>} : memref<2x16xf32, #tpu.memory_space<vmem>>, vector<2x16xf32>,
    } else {
    }
    %c0 = arith.constant 0 : index
    %c0_1 = arith.constant 0 : index
    %3 = vector.load %arg3[%c0, %c0_1] : memref<2x32xf32, #tpu.memory_space<vmem>>, vector<2x32xf32>
    %c0_2 = arith.constant 0 : index
    %c0_3 = arith.constant 0 : index
    %4 = vector.load %arg9[%c0_2, %c0_3] : memref<2x16xf32, #tpu.memory_space<vmem>>, vector<2x16xf32>
    %c0_4 = arith.constant 0 : index
    %c0_5 = arith.constant 0 : index
    %5 = vector.load %arg4[%c0_4, %c0_5] : memref<32x16xf32, #tpu.memory_space<vmem>>, vector<32x16xf32>
    %cst = arith.constant dense<0.000000e+00> : vector<2x16xf32>
    %6 = tpu.matmul %3, %5, %cst {dimension_numbers = #tpu.dot_dimension_numbers<[1], [0], [0], [1], [0, 0, 1, 1], [], []>} : vector<2x32xf32>, vector<32x16xf32>, vector<2x16xf32> -> vector<2x16xf32>
    %7 = arith.addf %4, %6 : vector<2x16xf32>
    %c0_6 = arith.constant 0 : index
    %c0_7 = arith.constant 0 : index
    %8 = vector.load %arg9[%c0_6, %c0_7] : memref<2x16xf32, #tpu.memory_space<vmem>>, vector<2x16xf32>
    tpu.vector_store %arg9[%c0_6, %c0_7], %7 {strides = array<i32>} : memref<2x16xf32, #tpu.memory_space<vmem>>, vector<2x16xf32>,
    %c0_8 = arith.constant 0 : index
    %c0_9 = arith.constant 0 : index
    %9 = vector.load %arg10[%c0_8, %c0_9] : memref<2x16xf32, #tpu.memory_space<vmem>>, vector<2x16xf32>
    %c0_10 = arith.constant 0 : index
    %c0_11 = arith.constant 0 : index
    %10 = vector.load %arg6[%c0_10, %c0_11] : memref<32x16xf32, #tpu.memory_space<vmem>>, vector<32x16xf32>
    %cst_12 = arith.constant dense<0.000000e+00> : vector<2x16xf32>
    %11 = tpu.matmul %3, %10, %cst_12 {dimension_numbers = #tpu.dot_dimension_numbers<[1], [0], [0], [1], [0, 0, 1, 1], [], []>} : vector<2x32xf32>, vector<32x16xf32>, vector<2x16xf32> -> vector<2x16xf32>
    %12 = arith.addf %9, %11 : vector<2x16xf32>
    %c0_13 = arith.constant 0 : index
    %c0_14 = arith.constant 0 : index
    %13 = vector.load %arg10[%c0_13, %c0_14] : memref<2x16xf32, #tpu.memory_space<vmem>>, vector<2x16xf32>
    tpu.vector_store %arg10[%c0_13, %c0_14], %12 {strides = array<i32>} : memref<2x16xf32, #tpu.memory_space<vmem>>, vector<2x16xf32>,
    %c0_i32_15 = arith.constant 0 : i32
    %14 = arith.cmpi eq, %arg2, %c0_i32_15 : i32
    %15 = arith.extui %14 : i1 to i32
    %c0_i32_16 = arith.constant 0 : i32
    %16 = arith.cmpi ne, %15, %c0_i32_16 : i32
    scf.if %16 {
      %c0_17 = arith.constant 0 : index
      %c0_18 = arith.constant 0 : index
      %17 = vector.load %arg9[%c0_17, %c0_18] : memref<2x16xf32, #tpu.memory_space<vmem>>, vector<2x16xf32>
      %c0_19 = arith.constant 0 : index
      %c0_20 = arith.constant 0 : index
      %18 = vector.load %arg5[%c0_19, %c0_20] : memref<1x16xf32, #tpu.memory_space<vmem>>, vector<1x16xf32>
      %19 = vector.broadcast %18 : vector<1x16xf32> to vector<2x16xf32>
      %20 = arith.addf %17, %19 : vector<2x16xf32>
      %c0_21 = arith.constant 0 : index
      %c0_22 = arith.constant 0 : index
      %21 = vector.load %arg10[%c0_21, %c0_22] : memref<2x16xf32, #tpu.memory_space<vmem>>, vector<2x16xf32>
      %c0_23 = arith.constant 0 : index
      %c0_24 = arith.constant 0 : index
      %22 = vector.load %arg7[%c0_23, %c0_24] : memref<1x16xf32, #tpu.memory_space<vmem>>, vector<1x16xf32>
      %23 = vector.broadcast %22 : vector<1x16xf32> to vector<2x16xf32>
      %24 = arith.addf %21, %23 : vector<2x16xf32>
      %25 = arith.maximumf %20, %24 : vector<2x16xf32>
      %c0_25 = arith.constant 0 : index
      %c0_26 = arith.constant 0 : index
      %26 = vector.load %arg8[%c0_25, %c0_26] : memref<2x16xf32, #tpu.memory_space<vmem>>, vector<2x16xf32>
      tpu.vector_store %arg8[%c0_25, %c0_26], %25 {strides = array<i32>} : memref<2x16xf32, #tpu.memory_space<vmem>>, vector<2x16xf32>,
    } else {
    }
    return
  }
  func.func @transform_0(%arg0: i32, %arg1: i32, %arg2: i32) -> (i32, i32) {
    %c0_i32 = arith.constant 0 : i32
    return %arg0, %arg2 : i32, i32
  }
  func.func @transform_1(%arg0: i32, %arg1: i32, %arg2: i32) -> (i32, i32) {
    %c0_i32 = arith.constant 0 : i32
    return %arg2, %arg1 : i32, i32
  }
  func.func @transform_2(%arg0: i32, %arg1: i32, %arg2: i32) -> (i32, i32) {
    %c0_i32 = arith.constant 0 : i32
    %c0_i32_0 = arith.constant 0 : i32
    return %c0_i32, %arg1 : i32, i32
  }
  func.func @transform_3(%arg0: i32, %arg1: i32, %arg2: i32) -> (i32, i32) {
    %c0_i32 = arith.constant 0 : i32
    return %arg2, %arg1 : i32, i32
  }
  func.func @transform_4(%arg0: i32, %arg1: i32, %arg2: i32) -> (i32, i32) {
    %c0_i32 = arith.constant 0 : i32
    %c0_i32_0 = arith.constant 0 : i32
    return %c0_i32, %arg1 : i32, i32
  }
  func.func @transform_5(%arg0: i32, %arg1: i32, %arg2: i32) -> (i32, i32) {
    %c0_i32 = arith.constant 0 : i32
    return %arg0, %arg1 : i32, i32
  }
}

</mosaic_0001>

<llo_original>
// kernel: tpu_custom_call.1
$region0: #{tpu_custom_call.1}
  #allocation0 [shape = 'u32[]', space=smem, size = 0x4, offset = 0x4, fixed_abs, tag = 'smem constant byte address 0x4 - core index']
  #allocation1 [shape = 'u32[144,128]{1,0:T(1,128)}', space=vmem, size = 0x12000, scoped, tag = 'internal scratch']
  #allocation2 [shape = 'f32[2,16]{1,0:T(2,128)}', space=vmem, size = 0x400, scoped, tag = 'scratch operand']
  #allocation3 [shape = 'f32[2,16]{1,0:T(2,128)}', space=vmem, size = 0x400, scoped, tag = 'scratch operand']
  %s0 = inlined_call_operand.vmem [shape: f32[2,32], index: 0, kind: input, shape index: {}]
  %s1 = inlined_call_operand.vmem [shape: f32[32,16], index: 1, kind: input, shape index: {}]
  %s2 = inlined_call_operand.vmem [shape: f32[1,16], index: 2, kind: input, shape index: {}]
  %s3 = inlined_call_operand.vmem [shape: f32[32,16], index: 3, kind: input, shape index: {}]
  %s4 = inlined_call_operand.vmem [shape: f32[1,16], index: 4, kind: input, shape index: {}]
  %s5 = inlined_call_operand.hbm [shape: f32[2,16], index: 5, kind: output, shape index: {}]
  %s6 = sld [smem:[#allocation0]]
  $region38: #{tpu_custom_call.1} parent=0
    _
  %s8 = ssub.s32 1, %s6
  %s9 = scalar_select 0, %s8, %s6
  $region1: #{tpu_custom_call.1} parent=0
    #allocation4 [shape = 'u8[1024]{0}', space=vmem, size = 0x400, scoped, tag = 'output window, operand 0, single buffered']
    #allocation5 [shape = 's32[1]{0}', space=sflag, size = 0x4, scoped, tag = 'scoped memory for tpu_custom_call.1']
    %10 = vsyncpa [#allocation5], 0
    // Predicated region
    $region2: #{tpu_custom_call.1} parent=1 // pred_check
      _
    $region3: #{tpu_custom_call.1} parent=1 // pred_check_branch
      %12 = sbr.rel (0) target = $region5
    $region4: #{tpu_custom_call.1} parent=1 // pred_region
      _
    $region5: #{tpu_custom_call.1} parent=1 // pred_fallthru
      _
    // Predicated region
    $region6: #{tpu_custom_call.1} parent=1 // pred_check
      _
    $region7: #{tpu_custom_call.1} parent=1 // pred_check_branch
      %14 = sbr.rel (0) target = $region9
    $region8: #{tpu_custom_call.1} parent=1 // pred_region
      _
    $region9: #{tpu_custom_call.1} parent=1 // pred_fallthru
      _
    // Predicated region
    $region10: #{tpu_custom_call.1} parent=1 // pred_check
      _
    $region11: #{tpu_custom_call.1} parent=1 // pred_check_branch
      %16 = sbr.rel (0) target = $region13
    $region12: #{tpu_custom_call.1} parent=1 // pred_region
      _
    $region13: #{tpu_custom_call.1} parent=1 // pred_fallthru
      _
    // Predicated region
    $region14: #{tpu_custom_call.1} parent=1 // pred_check
      _
    $region15: #{tpu_custom_call.1} parent=1 // pred_check_branch
      %18 = sbr.rel (0) target = $region17
    $region16: #{tpu_custom_call.1} parent=1 // pred_region
      _
    $region17: #{tpu_custom_call.1} parent=1 // pred_fallthru
      _
    // Predicated region
    $region18: #{tpu_custom_call.1} parent=1 // pred_check
      _
    $region19: #{tpu_custom_call.1} parent=1 // pred_check_branch
      %20 = sbr.rel (0) target = $region21
    $region20: #{tpu_custom_call.1} parent=1 // pred_region
      _
    $region21: #{tpu_custom_call.1} parent=1 // pred_fallthru
      _
    %p21 = scmp.eq.s32.totalorder 0, 0
    // Predicated region
    $region22: #{tpu_custom_call.1} parent=1 // pred_check
      %p22 = pneg %p21
    $region23: #{tpu_custom_call.1} parent=1 // pred_check_branch
      %24 = sbr.rel (%p22) target = $region25
    $region24: #{tpu_custom_call.1} parent=1 // pred_region
      %vm25 = vcmask 123904
      %26 = vst.msk [vmem:[#allocation2] sm:$0x3] %vm25, 0.0
      %27 = vst.msk [vmem:[#allocation3] sm:$0x3] %vm25, 0.0
    $region25: #{tpu_custom_call.1} parent=1 // pred_fallthru
      _
    %v28 = vld [vmem:[%s0] sm:$0x3]
    %v29 = vld [vmem:[#allocation2] sm:$0x3]
    %v30 = vld [vmem:[%s1] sm:$0xff]
    %v31 = vld [vmem:[%s1 + $0x8] sm:$0xff]
    %v32 = vld [vmem:[%s1 + $0x10] sm:$0xff]
    %v33 = vld [vmem:[%s1 + $0x18] sm:$0xff]
    %vm34 = vcmask 261120
    %v36 = vsel %vm34, %v28, 0
    %38 = vmatprep.subr.mxu0 0.0
    %39 = vmatpush1.msra.mxu0 0.0
    %40 = vmatprep.subr.mxu0 0.0
    %41 = vmatpush1.msra.mxu0 0.0
    %42 = vmatprep.subr.mxu0 0.0
    %43 = vmatpush1.msra.mxu0 0.0
    %44 = vmatprep.subr.mxu0 0.0
    %45 = vmatpush1.msra.mxu0 0.0
    %46 = vmatprep.subr.mxu0 0.0
    %47 = vmatpush1.msra.mxu0 0.0
    %48 = vmatprep.subr.mxu0 0.0
    %49 = vmatpush1.msra.mxu0 0.0
    %50 = vmatprep.subr.mxu0 0.0
    %51 = vmatpush1.msra.mxu0 0.0
    %52 = vmatprep.subr.mxu0 0.0
    %53 = vmatpush1.msra.mxu0 0.0
    %54 = vmatprep.subr.mxu0 0.0
    %55 = vmatpush1.msra.mxu0 0.0
    %56 = vmatprep.subr.mxu0 0.0
    %57 = vmatpush1.msra.mxu0 0.0
    %58 = vmatprep.subr.mxu0 0.0
    %59 = vmatpush1.msra.mxu0 0.0
    %60 = vmatprep.subr.mxu0 0.0
    %61 = vmatpush1.msra.mxu0 0.0
    %62 = vmatprep.subr.mxu0 0.0
    %63 = vmatpush1.msra.mxu0 %v33
    %64 = vmatprep.subr.mxu0 0.0
    %65 = vmatpush1.msra.mxu0 %v32
    %66 = vmatprep.subr.mxu0 0.0
    %67 = vmatpush1.msra.mxu0 %v31
    %68 = vmatprep.subr.mxu0 0.0
    %69 = vmatpush1.msra.mxu0 %v30
    %70 = vmatprep.subr.mxu0 0.0
    %71 = vmatpush2.msra.mxu0 0.0
    %72 = vmatprep.subr.mxu0 0.0
    %73 = vmatpush2.msra.mxu0 0.0
    %74 = vmatprep.subr.mxu0 0.0
    %75 = vmatpush2.msra.mxu0 0.0
    %76 = vmatprep.subr.mxu0 0.0
    %77 = vmatpush2.msra.mxu0 0.0
    %78 = vmatprep.subr.mxu0 0.0
    %79 = vmatpush2.msra.mxu0 0.0
    %80 = vmatprep.subr.mxu0 0.0
    %81 = vmatpush2.msra.mxu0 0.0
    %82 = vmatprep.subr.mxu0 0.0
    %83 = vmatpush2.msra.mxu0 0.0
    %84 = vmatprep.subr.mxu0 0.0
    %85 = vmatpush2.msra.mxu0 0.0
    %86 = vmatprep.subr.mxu0 0.0
    %87 = vmatpush2.msra.mxu0 0.0
    %88 = vmatprep.subr.mxu0 0.0
    %89 = vmatpush2.msra.mxu0 0.0
    %90 = vmatprep.subr.mxu0 0.0
    %91 = vmatpush2.msra.mxu0 0.0
    %92 = vmatprep.subr.mxu0 0.0
    %93 = vmatpush2.msra.mxu0 0.0
    %94 = vmatprep.subr.mxu0 0.0
    %95 = vmatpush2.msra.mxu0 0.0
    %96 = vmatprep.subr.mxu0 0.0
    %97 = vmatpush2.msra.mxu0 0.0
    %98 = vmatprep.subr.mxu0 0.0
    %99 = vmatpush2.msra.mxu0 0.0
    %100 = vmatprep.subr.mxu0 0.0
    %101 = vmatpush2.msra.mxu0 0.0
    %102 = vmatprep.mubr.f32.mxu0 0.0
    %103 = vmatmul.mubr.f32.gmra.mxu0 %v36
    %v104 = vpop.f32.mrf.mxu0
    %v105 = vadd.f32 0.0, %v104
    %v106 = vpop.f32.mrf.mxu0
    %107 = vdwg.mxu0
    %v108 = vadd.f32 %v29, %v105
    %vm109 = vcmask 123904
    %110 = vst.msk [vmem:[#allocation2] sm:$0x3] %vm109, %v108
    %v111 = vld [vmem:[#allocation3] sm:$0x3]
    %v112 = vld [vmem:[%s3] sm:$0xff]
    %v113 = vld [vmem:[%s3 + $0x8] sm:$0xff]
    %v114 = vld [vmem:[%s3 + $0x10] sm:$0xff]
    %v115 = vld [vmem:[%s3 + $0x18] sm:$0xff]
    %116 = vmatprep.subr.mxu0 0.0
    %117 = vmatpush1.msra.mxu0 0.0
    %118 = vmatprep.subr.mxu0 0.0
    %119 = vmatpush1.msra.mxu0 0.0
    %120 = vmatprep.subr.mxu0 0.0
    %121 = vmatpush1.msra.mxu0 0.0
    %122 = vmatprep.subr.mxu0 0.0
    %123 = vmatpush1.msra.mxu0 0.0
    %124 = vmatprep.subr.mxu0 0.0
    %125 = vmatpush1.msra.mxu0 0.0
    %126 = vmatprep.subr.mxu0 0.0
    %127 = vmatpush1.msra.mxu0 0.0
    %128 = vmatprep.subr.mxu0 0.0
    %129 = vmatpush1.msra.mxu0 0.0
    %130 = vmatprep.subr.mxu0 0.0
    %131 = vmatpush1.msra.mxu0 0.0
    %132 = vmatprep.subr.mxu0 0.0
    %133 = vmatpush1.msra.mxu0 0.0
    %134 = vmatprep.subr.mxu0 0.0
    %135 = vmatpush1.msra.mxu0 0.0
    %136 = vmatprep.subr.mxu0 0.0
    %137 = vmatpush1.msra.mxu0 0.0
    %138 = vmatprep.subr.mxu0 0.0
    %139 = vmatpush1.msra.mxu0 0.0
    %140 = vmatprep.subr.mxu0 0.0
    %141 = vmatpush1.msra.mxu0 %v115
    %142 = vmatprep.subr.mxu0 0.0
    %143 = vmatpush1.msra.mxu0 %v114
    %144 = vmatprep.subr.mxu0 0.0
    %145 = vmatpush1.msra.mxu0 %v113
    %146 = vmatprep.subr.mxu0 0.0
    %147 = vmatpush1.msra.mxu0 %v112
    %148 = vmatprep.subr.mxu0 0.0
    %149 = vmatpush2.msra.mxu0 0.0
    %150 = vmatprep.subr.mxu0 0.0
    %151 = vmatpush2.msra.mxu0 0.0
    %152 = vmatprep.subr.mxu0 0.0
    %153 = vmatpush2.msra.mxu0 0.0
    %154 = vmatprep.subr.mxu0 0.0
    %155 = vmatpush2.msra.mxu0 0.0
    %156 = vmatprep.subr.mxu0 0.0
    %157 = vmatpush2.msra.mxu0 0.0
    %158 = vmatprep.subr.mxu0 0.0
    %159 = vmatpush2.msra.mxu0 0.0
    %160 = vmatprep.subr.mxu0 0.0
    %161 = vmatpush2.msra.mxu0 0.0
    %162 = vmatprep.subr.mxu0 0.0
    %163 = vmatpush2.msra.mxu0 0.0
    %164 = vmatprep.subr.mxu0 0.0
    %165 = vmatpush2.msra.mxu0 0.0
    %166 = vmatprep.subr.mxu0 0.0
    %167 = vmatpush2.msra.mxu0 0.0
    %168 = vmatprep.subr.mxu0 0.0
    %169 = vmatpush2.msra.mxu0 0.0
    %170 = vmatprep.subr.mxu0 0.0
    %171 = vmatpush2.msra.mxu0 0.0
    %172 = vmatprep.subr.mxu0 0.0
    %173 = vmatpush2.msra.mxu0 0.0
    %174 = vmatprep.subr.mxu0 0.0
    %175 = vmatpush2.msra.mxu0 0.0
    %176 = vmatprep.subr.mxu0 0.0
    %177 = vmatpush2.msra.mxu0 0.0
    %178 = vmatprep.subr.mxu0 0.0
    %179 = vmatpush2.msra.mxu0 0.0
    %180 = vmatprep.mubr.f32.mxu0 0.0
    %181 = vmatmul.mubr.f32.gmra.mxu0 %v36
    %v182 = vpop.f32.mrf.mxu0
    %v183 = vadd.f32 0.0, %v182
    %v184 = vpop.f32.mrf.mxu0
    %185 = vdwg.mxu0
    %v186 = vadd.f32 %v111, %v183
    %187 = vst.msk [vmem:[#allocation3] sm:$0x3] %vm109, %v186
    // Predicated region
    $region26: #{tpu_custom_call.1} parent=1 // pred_check
      %p188 = pneg %p21
    $region27: #{tpu_custom_call.1} parent=1 // pred_check_branch
      %190 = sbr.rel (%p188) target = $region29
    $region28: #{tpu_custom_call.1} parent=1 // pred_region
      %v191 = vld [vmem:[#allocation2] sm:$0x3]
      %v192 = vld [vmem:[%s2] sm:$0x1]
      %v194 = vlaneseq
      %v195 = vshrl.u32 %v194, 7
      %v196 = vsub.s32 0, %v195
      %v197 = vrot.slane %v192, %v196
      %v199 = vadd.f32 %v191, %v197
      %v200 = vld [vmem:[#allocation3] sm:$0x3]
      %v201 = vld [vmem:[%s4] sm:$0x1]
      %v203 = vlaneseq
      %v204 = vshrl.u32 %v203, 7
      %v205 = vsub.s32 0, %v204
      %v206 = vrot.slane %v201, %v205
      %v208 = vadd.f32 %v200, %v206
      %v209 = vmax.f32 %v199, %v208
      %210 = vst.msk [vmem:[#allocation4] sm:$0x3] %vm109, %v209
    $region29: #{tpu_custom_call.1} parent=1 // pred_fallthru
      _
    // Predicated region
    $region30: #{tpu_custom_call.1} parent=1 // pred_check
      _
    $region31: #{tpu_custom_call.1} parent=1 // pred_check_branch
      %212 = sbr.rel (0) target = $region33
    $region32: #{tpu_custom_call.1} parent=1 // pred_region
      %s214 = ssub.s32 32, 32
      %215 = vsyncadd [#allocation5], %s214
      %s217 = sshll.u32 [#allocation4], 4
      %s218 = int_to_ptr.vmem [resolvable:$true] %s217
      %220 = dma.vmem_to_hbm [thread:$0]  %s218, 32, %s5, [#allocation5]
    $region33: #{tpu_custom_call.1} parent=1 // pred_fallthru
      _
    // Predicated region
    $region34: #{tpu_custom_call.1} parent=1 // pred_check
      _
    $region35: #{tpu_custom_call.1} parent=1 // pred_check_branch
      %222 = sbr.rel (0) target = $region37
    $region36: #{tpu_custom_call.1} parent=1 // pred_region
      %223 = dma.done [#allocation5], 32
    $region37: #{tpu_custom_call.1} parent=1 // pred_fallthru
      _
    %224 = vsyncpa [#allocation5], 1

</llo_original>
